<compile_context>
chip_gen: v7x
topology: tpu7x:2x2x1
jax: 0.10.0
libtpu: 0.0.40
codegen_flags: <defaults>
</compile_context>

<pallas_src>
import jax
import jax.numpy as jnp
from jax.experimental import pallas as pl
from jax.experimental.pallas import tpu as pltpu

# ---------------- model dims (small, consistent with the module) ------------
B, C_IN, H, W = 2, 4, 16, 16
KH, KW = 3, 3
C_OUT = 32                 # classifier feature channels
N_CLASSES = 10             # base (head) output logits
HW = H * W                 # 256  -> lane dim of the conv matmul
CKK = C_IN * KH * KW       # 36   im2col feature dim
CKK_AUG = 40               # CKK + 1 (bias row), rounded up to a sublane multiple
N_PAD = 128                # lane-dense logits, sliced to N_CLASSES in the wrapper


# ---------------- Pallas kernel: whole batch in one grid step ----------------
def transfer_kernel(patches_ref, conv_ref, head_ref, out_ref):
    # patches_ref: (CKK_AUG, B*HW)  im2col columns; row CKK == 1.0 (bias), rest 0-pad
    # conv_ref:    (C_OUT, CKK_AUG) flattened OIHW conv weight; col CKK == conv bias
    # head_ref:    (C_OUT+1, N_PAD) rows 0..C_OUT-1 = lin_w^T (zero-padded), last = lin_b
    # out_ref:     (B, N_PAD)       lane-dense logits (cols >= N_CLASSES are zero)
    feat = jnp.maximum(
        jnp.dot(conv_ref[...], patches_ref[...],
                preferred_element_type=jnp.float32),
        0.0)                                                   # (C_OUT, B*HW)  conv+bias+ReLU

    wl = head_ref[0:C_OUT, :]                                  # (C_OUT, N_PAD)
    bl = head_ref[C_OUT:C_OUT + 1, :]                          # (1, N_PAD)
    inv_hw = jnp.float32(1.0 / HW)

    rows = []
    for b in range(B):                                         # static unroll, B = 2
        seg = feat[:, b * HW:(b + 1) * HW]                     # (C_OUT, HW), lane-aligned slice
        pooled = jnp.sum(seg, axis=-1, keepdims=True) * inv_hw  # (C_OUT, 1)  lane reduce + mul
        # head: sum_c pooled[c] * wl[c, n] + bl[n]  (VPU mul + sublane reduce)
        rows.append(jnp.sum(pooled * wl, axis=0, keepdims=True) + bl)   # (1, N_PAD)
    out_ref[...] = jnp.concatenate(rows, axis=0)               # single (B, N_PAD) dense store


# ---------------- jitted wrapper: glue + pallas_call -------------------------
@jax.jit
def transfer_forward(x, conv_w, conv_b, lin_w, lin_b):
    """x: [B, C_IN, H, W] (NCHW like PyTorch). Returns logits [B, N_CLASSES]."""
    b, c, h, w = x.shape
    f32 = jnp.float32
    x = x.astype(f32)

    # im2col (pad=1, stride=1) with spatial on the last (lane) axis.
    # Feature ordering C-slow / kh / kw-fast to match a flattened OIHW weight.
    xp = jnp.pad(x, ((0, 0), (0, 0), (1, 1), (1, 1)))
    cols = []
    for dh in range(KH):
        for dw in range(KW):
            cols.append(xp[:, :, dh:dh + h, dw:dw + w])        # (B, C, H, W)
    patches = jnp.stack(cols, axis=2).reshape(b, CKK, h * w)   # (B, CKK, HW)
    patches = jnp.transpose(patches, (1, 0, 2)).reshape(CKK, b * h * w)  # (CKK, B*HW)
    patches_aug = jnp.concatenate(
        [patches,
         jnp.ones((1, b * h * w), f32),                        # bias row
         jnp.zeros((CKK_AUG - CKK - 1, b * h * w), f32)],
        axis=0)                                                # (CKK_AUG, B*HW)

    # conv weight OIHW -> (C_OUT, CKK) with bias folded in as an extra column
    wc = conv_w.reshape(C_OUT, CKK).astype(f32)
    conv_aug = jnp.concatenate(
        [wc,
         conv_b.reshape(C_OUT, 1).astype(f32),
         jnp.zeros((C_OUT, CKK_AUG - CKK - 1), f32)],
        axis=1)                                                # (C_OUT, CKK_AUG)

    # linear head packed into one lane-dense slab: rows 0..31 = wl^T, row 32 = bl
    wl_pad = jnp.zeros((C_OUT, N_PAD), f32).at[:, :N_CLASSES].set(lin_w.T.astype(f32))
    bl_pad = jnp.zeros((1, N_PAD), f32).at[0, :N_CLASSES].set(lin_b.astype(f32))
    head = jnp.concatenate([wl_pad, bl_pad], axis=0)           # (C_OUT + 1, N_PAD)

    out_pad = pl.pallas_call(
        transfer_kernel,
        out_shape=jax.ShapeDtypeStruct((b, N_PAD), f32),
        grid_spec=pltpu.PrefetchScalarGridSpec(
            num_scalar_prefetch=0,
            grid=(1,),                                         # whole batch, single step
            in_specs=[
                pl.BlockSpec((CKK_AUG, b * h * w), lambda i: (0, 0)),
                pl.BlockSpec((C_OUT, CKK_AUG), lambda i: (0, 0)),
                pl.BlockSpec((C_OUT + 1, N_PAD), lambda i: (0, 0)),
            ],
            out_specs=pl.BlockSpec((b, N_PAD), lambda i: (0, 0)),
        ),
        compiler_params=pltpu.CompilerParams(
            dimension_semantics=("arbitrary",)),
    )(patches_aug, conv_aug, head)

    return out_pad[:, :N_CLASSES]                              # fused slice under jit


# ---------------- pure-JAX reference for a correctness check ----------------
def reference_forward(x, conv_w, conv_b, lin_w, lin_b):
    conv = jax.lax.conv_general_dilated(
        x, conv_w, window_strides=(1, 1), padding="SAME",
        dimension_numbers=("NCHW", "OIHW", "NCHW"))
    conv = conv + conv_b[None, :, None, None]
    feat = jnp.maximum(conv, 0.0)
    pooled = jnp.mean(feat, axis=(2, 3))                       # [B, C_OUT]
    return pooled @ lin_w.T + lin_b[None, :]                   # [B, N_CLASSES]


if __name__ == "__main__":
    key = jax.random.PRNGKey(0)
    kx, kw1, kb1, kw2, kb2 = jax.random.split(key, 5)

    x = jax.random.normal(kx, (B, C_IN, H, W), dtype=jnp.float32)
    # deterministic synthetic parameters (shapes follow the nn.Module layers)
    conv_w = jax.random.normal(kw1, (C_OUT, C_IN, KH, KW), dtype=jnp.float32) * 0.1
    conv_b = jax.random.normal(kb1, (C_OUT,), dtype=jnp.float32) * 0.1
    lin_w = jax.random.normal(kw2, (N_CLASSES, C_OUT), dtype=jnp.float32) * 0.1
    lin_b = jax.random.normal(kb2, (N_CLASSES,), dtype=jnp.float32) * 0.1

    logits = transfer_forward(x, conv_w, conv_b, lin_w, lin_b)
    jax.block_until_ready(logits)

    ref = reference_forward(x, conv_w, conv_b, lin_w, lin_b)
    assert logits.shape == (B, N_CLASSES)
    assert jnp.allclose(logits, ref, atol=1e-4, rtol=1e-4), "mismatch vs reference"

    print("KERNEL_OK")
</pallas_src>

<mosaic_0001>
module attributes {stable_mosaic.version = 11 : i64} {
  func.func @transfer_kernel(%arg0: i32, %arg1: memref<40x512xf32, #tpu.memory_space<vmem>>, %arg2: memref<32x40xf32, #tpu.memory_space<vmem>>, %arg3: memref<33x128xf32, #tpu.memory_space<vmem>>, %arg4: memref<2x128xf32, #tpu.memory_space<vmem>>) attributes {dimension_semantics = [#tpu.dimension_semantics<arbitrary>], iteration_bounds = array<i64: 1>, scalar_prefetch = 0 : i64, scratch_operands = 0 : i64, tpu.core_type = #tpu.core_type<tc>, window_params = [{pipeline_mode = #tpu.pipeline_mode<synchronous>, transform_indices = @transform_0, window_bounds = array<i64: 40, 512>}, {pipeline_mode = #tpu.pipeline_mode<synchronous>, transform_indices = @transform_1, window_bounds = array<i64: 32, 40>}, {pipeline_mode = #tpu.pipeline_mode<synchronous>, transform_indices = @transform_2, window_bounds = array<i64: 33, 128>}, {pipeline_mode = #tpu.pipeline_mode<synchronous>, transform_indices = @transform_3, window_bounds = array<i64: 2, 128>}]} {
    %c0 = arith.constant 0 : index
    %c0_0 = arith.constant 0 : index
    %0 = vector.load %arg2[%c0, %c0_0] : memref<32x40xf32, #tpu.memory_space<vmem>>, vector<32x40xf32>
    %c0_1 = arith.constant 0 : index
    %c0_2 = arith.constant 0 : index
    %1 = vector.load %arg1[%c0_1, %c0_2] : memref<40x512xf32, #tpu.memory_space<vmem>>, vector<40x512xf32>
    %cst = arith.constant dense<0.000000e+00> : vector<32x512xf32>
    %2 = tpu.matmul %0, %1, %cst {dimension_numbers = #tpu.dot_dimension_numbers<[1], [0], [0], [1], [0, 0, 1, 1], [], []>} : vector<32x40xf32>, vector<40x512xf32>, vector<32x512xf32> -> vector<32x512xf32>
    %cst_3 = arith.constant 0.000000e+00 : f32
    %3 = vector.broadcast %cst_3 : f32 to vector<32x512xf32>
    %4 = arith.maximumf %2, %3 : vector<32x512xf32>
    %c0_4 = arith.constant 0 : index
    %c0_5 = arith.constant 0 : index
    %5 = vector.load %arg3[%c0_4, %c0_5] : memref<33x128xf32, #tpu.memory_space<vmem>>, vector<32x128xf32>
    %c32 = arith.constant 32 : index
    %c0_6 = arith.constant 0 : index
    %6 = vector.load %arg3[%c32, %c0_6] : memref<33x128xf32, #tpu.memory_space<vmem>>, vector<1x128xf32>
    %7 = vector.extract_strided_slice %4 {offsets = [0, 0], sizes = [32, 256], strides = [1, 1]} : vector<32x512xf32> to vector<32x256xf32>
    %cst_7 = arith.constant dense<0.000000e+00> : vector<32xf32>
    %8 = vector.multi_reduction <add>, %7, %cst_7 [1] : vector<32x256xf32> to vector<32xf32>
    %9 = vector.shape_cast %8 : vector<32xf32> to vector<32x1xf32>
    %cst_8 = arith.constant 3.906250e-03 : f32
    %10 = vector.broadcast %cst_8 : f32 to vector<32x1xf32>
    %11 = arith.mulf %9, %10 : vector<32x1xf32>
    %12 = vector.broadcast %11 : vector<32x1xf32> to vector<32x128xf32>
    %13 = arith.mulf %12, %5 : vector<32x128xf32>
    %cst_9 = arith.constant dense<0.000000e+00> : vector<128xf32>
    %14 = vector.multi_reduction <add>, %13, %cst_9 [0] : vector<32x128xf32> to vector<128xf32>
    %15 = vector.shape_cast %14 : vector<128xf32> to vector<1x128xf32>
    %16 = arith.addf %15, %6 : vector<1x128xf32>
    %17 = vector.extract_strided_slice %4 {offsets = [0, 256], sizes = [32, 256], strides = [1, 1]} : vector<32x512xf32> to vector<32x256xf32>
    %cst_10 = arith.constant dense<0.000000e+00> : vector<32xf32>
    %18 = vector.multi_reduction <add>, %17, %cst_10 [1] : vector<32x256xf32> to vector<32xf32>
    %19 = vector.shape_cast %18 : vector<32xf32> to vector<32x1xf32>
    %cst_11 = arith.constant 3.906250e-03 : f32
    %20 = vector.broadcast %cst_11 : f32 to vector<32x1xf32>
    %21 = arith.mulf %19, %20 : vector<32x1xf32>
    %22 = vector.broadcast %21 : vector<32x1xf32> to vector<32x128xf32>
    %23 = arith.mulf %22, %5 : vector<32x128xf32>
    %cst_12 = arith.constant dense<0.000000e+00> : vector<128xf32>
    %24 = vector.multi_reduction <add>, %23, %cst_12 [0] : vector<32x128xf32> to vector<128xf32>
    %25 = vector.shape_cast %24 : vector<128xf32> to vector<1x128xf32>
    %26 = arith.addf %25, %6 : vector<1x128xf32>
    %27 = tpu.concatenate %16, %26 in 0 : vector<1x128xf32>, vector<1x128xf32> -> vector<2x128xf32>
    %c0_13 = arith.constant 0 : index
    %c0_14 = arith.constant 0 : index
    %28 = vector.load %arg4[%c0_13, %c0_14] : memref<2x128xf32, #tpu.memory_space<vmem>>, vector<2x128xf32>
    tpu.vector_store %arg4[%c0_13, %c0_14], %27 {strides = array<i32>} : memref<2x128xf32, #tpu.memory_space<vmem>>, vector<2x128xf32>,
    return
  }
  func.func @transform_0(%arg0: i32) -> (i32, i32) {
    %c0_i32 = arith.constant 0 : i32
    %c0_i32_0 = arith.constant 0 : i32
    %c0_i32_1 = arith.constant 0 : i32
    return %c0_i32, %c0_i32_0 : i32, i32
  }
  func.func @transform_1(%arg0: i32) -> (i32, i32) {
    %c0_i32 = arith.constant 0 : i32
    %c0_i32_0 = arith.constant 0 : i32
    %c0_i32_1 = arith.constant 0 : i32
    return %c0_i32, %c0_i32_0 : i32, i32
  }
  func.func @transform_2(%arg0: i32) -> (i32, i32) {
    %c0_i32 = arith.constant 0 : i32
    %c0_i32_0 = arith.constant 0 : i32
    %c0_i32_1 = arith.constant 0 : i32
    return %c0_i32, %c0_i32_0 : i32, i32
  }
  func.func @transform_3(%arg0: i32) -> (i32, i32) {
    %c0_i32 = arith.constant 0 : i32
    %c0_i32_0 = arith.constant 0 : i32
    %c0_i32_1 = arith.constant 0 : i32
    return %c0_i32, %c0_i32_0 : i32, i32
  }
}

</mosaic_0001>

<llo_original>
// kernel: transfer_forward.1
$region0: #{transfer_forward.1}
  #allocation0 [shape = 'u32[]', space=smem, size = 0x4, offset = 0x4, fixed_abs, tag = 'smem constant byte address 0x4 - core index']
  #allocation1 [shape = 'u32[144,128]{1,0:T(1,128)}', space=vmem, size = 0x12000, scoped, tag = 'internal scratch']
  %s0 = inlined_call_operand.vmem [shape: f32[40,512], index: 0, kind: input, shape index: {}]
  %s1 = inlined_call_operand.vmem [shape: f32[32,40], index: 1, kind: input, shape index: {}]
  %s2 = inlined_call_operand.vmem [shape: f32[33,128], index: 2, kind: input, shape index: {}]
  %s3 = inlined_call_operand.hbm [shape: f32[2,128], index: 3, kind: output, shape index: {}]
  %s4 = sld [smem:[#allocation0]]
  $region22: #{transfer_forward.1} parent=0
    _
  %s6 = ssub.s32 1, %s4
  %s7 = scalar_select 0, %s6, %s4
  $region1: #{transfer_forward.1} parent=0
    #allocation2 [shape = 'u8[1024]{0}', space=vmem, size = 0x400, scoped, tag = 'output window, operand 0, single buffered']
    #allocation3 [shape = 's32[1]{0}', space=sflag, size = 0x4, scoped, tag = 'scoped memory for transfer_forward.1']
    %8 = vsyncpa [#allocation3], 0
    // Predicated region
    $region2: #{transfer_forward.1} parent=1 // pred_check
      _
    $region3: #{transfer_forward.1} parent=1 // pred_check_branch
      %10 = sbr.rel (0) target = $region5
    $region4: #{transfer_forward.1} parent=1 // pred_region
      _
    $region5: #{transfer_forward.1} parent=1 // pred_fallthru
      _
    // Predicated region
    $region6: #{transfer_forward.1} parent=1 // pred_check
      _
    $region7: #{transfer_forward.1} parent=1 // pred_check_branch
      %12 = sbr.rel (0) target = $region9
    $region8: #{transfer_forward.1} parent=1 // pred_region
      _
    $region9: #{transfer_forward.1} parent=1 // pred_fallthru
      _
    // Predicated region
    $region10: #{transfer_forward.1} parent=1 // pred_check
      _
    $region11: #{transfer_forward.1} parent=1 // pred_check_branch
      %14 = sbr.rel (0) target = $region13
    $region12: #{transfer_forward.1} parent=1 // pred_region
      _
    $region13: #{transfer_forward.1} parent=1 // pred_fallthru
      _
    %v15 = vld [vmem:[%s1] sm:$0xff]
    %v16 = vld [vmem:[%s1 + $0x8] sm:$0xff]
    %v17 = vld [vmem:[%s1 + $0x10] sm:$0xff]
    %v18 = vld [vmem:[%s1 + $0x18] sm:$0xff]
    %v19 = vld [vmem:[%s0] sm:$0xff]
    %v20 = vld [vmem:[%s0 + $0x8] sm:$0xff]
    %v21 = vld [vmem:[%s0 + $0x10] sm:$0xff]
    %v22 = vld [vmem:[%s0 + $0x18] sm:$0xff]
    %v23 = vld [vmem:[%s0 + $0x20] sm:$0xff]
    %v24 = vld [vmem:[%s0 + $0x28] sm:$0xff]
    %v25 = vld [vmem:[%s0 + $0x30] sm:$0xff]
    %v26 = vld [vmem:[%s0 + $0x38] sm:$0xff]
    %v27 = vld [vmem:[%s0 + $0x40] sm:$0xff]
    %v28 = vld [vmem:[%s0 + $0x48] sm:$0xff]
    %v29 = vld [vmem:[%s0 + $0x50] sm:$0xff]
    %v30 = vld [vmem:[%s0 + $0x58] sm:$0xff]
    %v31 = vld [vmem:[%s0 + $0x60] sm:$0xff]
    %v32 = vld [vmem:[%s0 + $0x68] sm:$0xff]
    %v33 = vld [vmem:[%s0 + $0x70] sm:$0xff]
    %v34 = vld [vmem:[%s0 + $0x78] sm:$0xff]
    %v35 = vld [vmem:[%s0 + $0x80] sm:$0xff]
    %v36 = vld [vmem:[%s0 + $0x88] sm:$0xff]
    %v37 = vld [vmem:[%s0 + $0x90] sm:$0xff]
    %v38 = vld [vmem:[%s0 + $0x98] sm:$0xff]
    %vm39 = vcmask 326656
    %v41 = vsel %vm39, %v15, 0
    %v44 = vsel %vm39, %v16, 0
    %v47 = vsel %vm39, %v17, 0
    %v50 = vsel %vm39, %v18, 0
    %52 = vmatprep.subr.mxu0 %v20
    %53 = vmatpush1.msra.mxu0 %v19
    %54 = vmatprep.subr.mxu0 %v24
    %55 = vmatpush1.msra.mxu0 %v23
    %56 = vmatprep.subr.mxu0 %v28
    %57 = vmatpush1.msra.mxu0 %v27
    %58 = vmatprep.subr.mxu0 %v32
    %59 = vmatpush1.msra.mxu0 %v31
    %60 = vmatprep.subr.mxu0 %v36
    %61 = vmatpush1.msra.mxu0 %v35
    %62 = vmatprep.subr.mxu0 0.0
    %63 = vmatpush1.msra.mxu0 0.0
    %64 = vmatprep.subr.mxu0 0.0
    %65 = vmatpush1.msra.mxu0 0.0
    %66 = vmatprep.subr.mxu0 0.0
    %67 = vmatpush1.msra.mxu0 0.0
    %68 = vmatprep.subr.mxu0 0.0
    %69 = vmatpush1.msra.mxu0 0.0
    %70 = vmatprep.subr.mxu0 0.0
    %71 = vmatpush1.msra.mxu0 0.0
    %72 = vmatprep.subr.mxu0 0.0
    %73 = vmatpush1.msra.mxu0 0.0
    %74 = vmatprep.subr.mxu0 0.0
    %75 = vmatpush1.msra.mxu0 0.0
    %76 = vmatprep.subr.mxu0 0.0
    %77 = vmatpush1.msra.mxu0 0.0
    %78 = vmatprep.subr.mxu0 0.0
    %79 = vmatpush1.msra.mxu0 0.0
    %80 = vmatprep.subr.mxu0 0.0
    %81 = vmatpush1.msra.mxu0 0.0
    %82 = vmatprep.subr.mxu0 0.0
    %83 = vmatpush1.msra.mxu0 0.0
    %84 = vmatprep.subr.mxu0 0.0
    %85 = vmatpush1.msra.mxu0 0.0
    %86 = vmatprep.subr.mxu0 0.0
    %87 = vmatpush1.msra.mxu0 0.0
    %88 = vmatprep.subr.mxu0 0.0
    %89 = vmatpush1.msra.mxu0 0.0
    %90 = vmatprep.subr.mxu0 0.0
    %91 = vmatpush1.msra.mxu0 0.0
    %92 = vmatprep.subr.mxu0 0.0
    %93 = vmatpush1.msra.mxu0 0.0
    %94 = vmatprep.subr.mxu0 0.0
    %95 = vmatpush1.msra.mxu0 0.0
    %96 = vmatprep.subr.mxu0 0.0
    %97 = vmatpush1.msra.mxu0 0.0
    %98 = vmatprep.subr.mxu0 0.0
    %99 = vmatpush1.msra.mxu0 0.0
    %100 = vmatprep.subr.mxu0 0.0
    %101 = vmatpush1.msra.mxu0 0.0
    %102 = vmatprep.subr.mxu0 0.0
    %103 = vmatpush1.msra.mxu0 0.0
    %104 = vmatprep.subr.mxu0 0.0
    %105 = vmatpush1.msra.mxu0 0.0
    %106 = vmatprep.subr.mxu0 0.0
    %107 = vmatpush1.msra.mxu0 0.0
    %108 = vmatprep.subr.mxu0 0.0
    %109 = vmatpush1.msra.mxu0 0.0
    %110 = vmatprep.subr.mxu0 0.0
    %111 = vmatpush1.msra.mxu0 0.0
    %112 = vmatprep.subr.mxu0 0.0
    %113 = vmatpush1.msra.mxu0 0.0
    %114 = vmatprep.subr.mxu0 0.0
    %115 = vmatpush1.msra.mxu0 0.0
    %116 = vmatprep.mubr.f32.mxu0 0.0
    %117 = vmatmul.mubr.f32.gmra.mrb[0].mxu0 %v41
    %v118 = vpop.f32.mrb[0].mxu0
    %v119 = vadd.f32 0.0, %v118
    %v120 = vpop.f32.mrb[0].mxu0
    %v121 = vadd.f32 0.0, %v120
    %122 = vmatprep.mubr.f32.mxu0 0.0
    %123 = vmatmul.mubr.f32.gmra.mrb[0].mxu0 %v44
    %v124 = vpop.f32.mrb[0].mxu0
    %v125 = vadd.f32 0.0, %v124
    %v126 = vpop.f32.mrb[0].mxu0
    %v127 = vadd.f32 0.0, %v126
    %128 = vmatprep.mubr.f32.mxu0 0.0
    %129 = vmatmul.mubr.f32.gmra.mrb[0].mxu0 %v47
    %v130 = vpop.f32.mrb[0].mxu0
    %v131 = vadd.f32 0.0, %v130
    %v132 = vpop.f32.mrb[0].mxu0
    %v133 = vadd.f32 0.0, %v132
    %134 = vmatprep.mubr.f32.mxu0 0.0
    %135 = vmatmul.mubr.f32.gmra.mrb[0].mxu0 %v50
    %v136 = vpop.f32.mrb[0].mxu0
    %v137 = vadd.f32 0.0, %v136
    %v138 = vpop.f32.mrb[0].mxu0
    %v139 = vadd.f32 0.0, %v138
    %140 = vdwg.mxu0
    %141 = vmatprep.subr.mxu0 %v22
    %142 = vmatpush1.msra.mxu0 %v21
    %143 = vmatprep.subr.mxu0 %v26
    %144 = vmatpush1.msra.mxu0 %v25
    %145 = vmatprep.subr.mxu0 %v30
    %146 = vmatpush1.msra.mxu0 %v29
    %147 = vmatprep.subr.mxu0 %v34
    %148 = vmatpush1.msra.mxu0 %v33
    %149 = vmatprep.subr.mxu0 %v38
    %150 = vmatpush1.msra.mxu0 %v37
    %151 = vmatprep.subr.mxu0 0.0
    %152 = vmatpush1.msra.mxu0 0.0
    %153 = vmatprep.subr.mxu0 0.0
    %154 = vmatpush1.msra.mxu0 0.0
    %155 = vmatprep.subr.mxu0 0.0
    %156 = vmatpush1.msra.mxu0 0.0
    %157 = vmatprep.subr.mxu0 0.0
    %158 = vmatpush1.msra.mxu0 0.0
    %159 = vmatprep.subr.mxu0 0.0
    %160 = vmatpush1.msra.mxu0 0.0
    %161 = vmatprep.subr.mxu0 0.0
    %162 = vmatpush1.msra.mxu0 0.0
    %163 = vmatprep.subr.mxu0 0.0
    %164 = vmatpush1.msra.mxu0 0.0
    %165 = vmatprep.subr.mxu0 0.0
    %166 = vmatpush1.msra.mxu0 0.0
    %167 = vmatprep.subr.mxu0 0.0
    %168 = vmatpush1.msra.mxu0 0.0
    %169 = vmatprep.subr.mxu0 0.0
    %170 = vmatpush1.msra.mxu0 0.0
    %171 = vmatprep.subr.mxu0 0.0
    %172 = vmatpush1.msra.mxu0 0.0
    %173 = vmatprep.subr.mxu0 0.0
    %174 = vmatpush1.msra.mxu0 0.0
    %175 = vmatprep.subr.mxu0 0.0
    %176 = vmatpush1.msra.mxu0 0.0
    %177 = vmatprep.subr.mxu0 0.0
    %178 = vmatpush1.msra.mxu0 0.0
    %179 = vmatprep.subr.mxu0 0.0
    %180 = vmatpush1.msra.mxu0 0.0
    %181 = vmatprep.subr.mxu0 0.0
    %182 = vmatpush1.msra.mxu0 0.0
    %183 = vmatprep.subr.mxu0 0.0
    %184 = vmatpush1.msra.mxu0 0.0
    %185 = vmatprep.subr.mxu0 0.0
    %186 = vmatpush1.msra.mxu0 0.0
    %187 = vmatprep.subr.mxu0 0.0
    %188 = vmatpush1.msra.mxu0 0.0
    %189 = vmatprep.subr.mxu0 0.0
    %190 = vmatpush1.msra.mxu0 0.0
    %191 = vmatprep.subr.mxu0 0.0
    %192 = vmatpush1.msra.mxu0 0.0
    %193 = vmatprep.subr.mxu0 0.0
    %194 = vmatpush1.msra.mxu0 0.0
    %195 = vmatprep.subr.mxu0 0.0
    %196 = vmatpush1.msra.mxu0 0.0
    %197 = vmatprep.subr.mxu0 0.0
    %198 = vmatpush1.msra.mxu0 0.0
    %199 = vmatprep.subr.mxu0 0.0
    %200 = vmatpush1.msra.mxu0 0.0
    %201 = vmatprep.subr.mxu0 0.0
    %202 = vmatpush1.msra.mxu0 0.0
    %203 = vmatprep.subr.mxu0 0.0
    %204 = vmatpush1.msra.mxu0 0.0
    %205 = vmatprep.mubr.f32.mxu0 0.0
    %206 = vmatmul.mubr.f32.gmra.mrb[0].mxu0 %v41
    %v207 = vpop.f32.mrb[0].mxu0
    %v208 = vadd.f32 0.0, %v207
    %v209 = vpop.f32.mrb[0].mxu0
    %v210 = vadd.f32 0.0, %v209
    %211 = vmatprep.mubr.f32.mxu0 0.0
    %212 = vmatmul.mubr.f32.gmra.mrb[0].mxu0 %v44
    %v213 = vpop.f32.mrb[0].mxu0
    %v214 = vadd.f32 0.0, %v213
    %v215 = vpop.f32.mrb[0].mxu0
    %v216 = vadd.f32 0.0, %v215
    %217 = vmatprep.mubr.f32.mxu0 0.0
    %218 = vmatmul.mubr.f32.gmra.mrb[0].mxu0 %v47
    %v219 = vpop.f32.mrb[0].mxu0
    %v220 = vadd.f32 0.0, %v219
    %v221 = vpop.f32.mrb[0].mxu0
    %v222 = vadd.f32 0.0, %v221
    %223 = vmatprep.mubr.f32.mxu0 0.0
    %224 = vmatmul.mubr.f32.gmra.mrb[0].mxu0 %v50
    %v225 = vpop.f32.mrb[0].mxu0
    %v226 = vadd.f32 0.0, %v225
    %v227 = vpop.f32.mrb[0].mxu0
    %v228 = vadd.f32 0.0, %v227
    %229 = vdwg.mxu0
    %v230 = vmax.f32 %v119, 0.0
    %v231 = vmax.f32 %v121, 0.0
    %v232 = vmax.f32 %v208, 0.0
    %v233 = vmax.f32 %v210, 0.0
    %v234 = vmax.f32 %v125, 0.0
    %v235 = vmax.f32 %v127, 0.0
    %v236 = vmax.f32 %v214, 0.0
    %v237 = vmax.f32 %v216, 0.0
    %v238 = vmax.f32 %v131, 0.0
    %v239 = vmax.f32 %v133, 0.0
    %v240 = vmax.f32 %v220, 0.0
    %v241 = vmax.f32 %v222, 0.0
    %v242 = vmax.f32 %v137, 0.0
    %v243 = vmax.f32 %v139, 0.0
    %v244 = vmax.f32 %v226, 0.0
    %v245 = vmax.f32 %v228, 0.0
    %v246 = vld [vmem:[%s2] sm:$0xff]
    %v247 = vld [vmem:[%s2 + $0x8] sm:$0xff]
    %v248 = vld [vmem:[%s2 + $0x10] sm:$0xff]
    %v249 = vld [vmem:[%s2 + $0x18] sm:$0xff]
    %v250 = vld [vmem:[%s2 + $0x20] sm:$0x1]
    %v251 = vadd.f32 %v230, %v231
    %252 = vadd.xlane.f32.xlu0 %v251
    %v253 = vpop.xlane.xlu0 %252
    %v254 = vadd.f32 %v234, %v235
    %255 = vadd.xlane.f32.xlu0 %v254
    %v256 = vpop.xlane.xlu0 %255
    %v257 = vadd.f32 %v238, %v239
    %258 = vadd.xlane.f32.xlu0 %v257
    %v259 = vpop.xlane.xlu0 %258
    %v260 = vadd.f32 %v242, %v243
    %261 = vadd.xlane.f32.xlu0 %v260
    %v262 = vpop.xlane.xlu0 %261
    %v263 = vmul.f32 %v253, 0.00390625
    %v264 = vmul.f32 %v256, 0.00390625
    %v265 = vmul.f32 %v259, 0.00390625
    %v266 = vmul.f32 %v262, 0.00390625
    %v267 = vmul.f32 %v263, %v246
    %v268 = vmul.f32 %v264, %v247
    %v269 = vmul.f32 %v265, %v248
    %v270 = vmul.f32 %v266, %v249
    %v271 = vadd.f32 %v267, %v268
    %v272 = vadd.f32 %v271, %v269
    %v273 = vadd.f32 %v272, %v270
    %v274 = vrot.slane %v273, 4
    %v275 = vadd.f32 %v273, %v274
    %v276 = vrot.slane %v275, 2
    %v277 = vadd.f32 %v275, %v276
    %v278 = vrot.slane %v277, 1
    %v279 = vadd.f32 %v277, %v278
    %v280 = vadd.f32 %v279, %v250
    %v281 = vadd.f32 %v232, %v233
    %282 = vadd.xlane.f32.xlu0 %v281
    %v283 = vpop.xlane.xlu0 %282
    %v284 = vadd.f32 %v236, %v237
    %285 = vadd.xlane.f32.xlu0 %v284
    %v286 = vpop.xlane.xlu0 %285
    %v287 = vadd.f32 %v240, %v241
    %288 = vadd.xlane.f32.xlu0 %v287
    %v289 = vpop.xlane.xlu0 %288
    %v290 = vadd.f32 %v244, %v245
    %291 = vadd.xlane.f32.xlu0 %v290
    %v292 = vpop.xlane.xlu0 %291
    %v293 = vmul.f32 %v283, 0.00390625
    %v294 = vmul.f32 %v286, 0.00390625
    %v295 = vmul.f32 %v289, 0.00390625
    %v296 = vmul.f32 %v292, 0.00390625
    %v297 = vmul.f32 %v293, %v246
    %v298 = vmul.f32 %v294, %v247
    %v299 = vmul.f32 %v295, %v248
    %v300 = vmul.f32 %v296, %v249
    %v301 = vadd.f32 %v297, %v298
    %v302 = vadd.f32 %v301, %v299
    %v303 = vadd.f32 %v302, %v300
    %v304 = vrot.slane %v303, 4
    %v305 = vadd.f32 %v303, %v304
    %v306 = vrot.slane %v305, 2
    %v307 = vadd.f32 %v305, %v306
    %v308 = vrot.slane %v307, 1
    %v309 = vadd.f32 %v307, %v308
    %v310 = vadd.f32 %v309, %v250
    %v312 = vrot.slane %v310, 7
    %vm314 = vcmask 1040384
    %v315 = vsel %vm314, %v280, %v312
    %316 = vst [vmem:[#allocation2] sm:$0x3] %v315
    // Predicated region
    $region14: #{transfer_forward.1} parent=1 // pred_check
      _
    $region15: #{transfer_forward.1} parent=1 // pred_check_branch
      %318 = sbr.rel (0) target = $region17
    $region16: #{transfer_forward.1} parent=1 // pred_region
      %s320 = ssub.s32 32, 32
      %321 = vsyncadd [#allocation3], %s320
      %s323 = sshll.u32 [#allocation2], 4
      %s324 = int_to_ptr.vmem [resolvable:$true] %s323
      %326 = dma.vmem_to_hbm [thread:$0]  %s324, 32, %s3, [#allocation3]
    $region17: #{transfer_forward.1} parent=1 // pred_fallthru
      _
    // Predicated region
    $region18: #{transfer_forward.1} parent=1 // pred_check
      _
    $region19: #{transfer_forward.1} parent=1 // pred_check_branch
      %328 = sbr.rel (0) target = $region21
    $region20: #{transfer_forward.1} parent=1 // pred_region
      %329 = dma.done [#allocation3], 32
    $region21: #{transfer_forward.1} parent=1 // pred_fallthru
      _
    %330 = vsyncpa [#allocation3], 1

</llo_original>
